<compile_context>
chip_gen: v7x
topology: tpu7x:2x2x1
jax: 0.10.0
libtpu: 0.0.40
codegen_flags: <defaults>
</compile_context>

<pallas_src>
import jax
import jax.numpy as jnp
import numpy as np
from jax.experimental import pallas as pl
from jax.experimental.pallas import tpu as pltpu

IMG = 16                       # imgWidth == imgHeight (forward needs a square, batch-1 input)
NR_FILT = 3
KSIZE = 5
POOL = 2
OUT_SIZE = 10
CONV_OUT = IMG - (KSIZE - 1)   # 12
POOL_OUT = CONV_OUT // POOL    # 6
NG = POOL_OUT * POOL_OUT       # 36 pooled spatial positions
NPH = POOL * POOL              # 4 pool-window phases
NTAP = KSIZE * KSIZE           # 25 conv taps
FC_IN = NR_FILT * NG           # 108

# Static im2col index maps (module-level constants), rows ordered (phase, tap).
_p = np.arange(NPH); _pi, _pj = _p // POOL, _p % POOL
_k = np.arange(NTAP); _di, _dj = _k // KSIZE, _k % KSIZE
_g = np.arange(NG); _gi, _gj = _g // POOL_OUT, _g % POOL_OUT
_ROWS = ((POOL * _gi)[None, None, :] + _pi[:, None, None]
         + _di[None, :, None]).reshape(NPH * NTAP, NG)          # (100, 36)
_COLS = ((POOL * _gj)[None, None, :] + _pj[:, None, None]
         + _dj[None, :, None]).reshape(NPH * NTAP, NG)          # (100, 36)
# Flat gather indices into the augmented image [x.ravel(), 1.0]; the extra
# last row (index IMG*IMG) picks the constant 1.0 -> bias row of the im2col.
_FLATIDX = np.concatenate(
    [_ROWS * IMG + _COLS, np.full((1, NG), IMG * IMG)], axis=0).astype(np.int32)  # (101, 36)


def simple_cnn_kernel(p_ref, wbig_ref, fcw_ref, fcb_ref, out_ref):
    """Fused conv+bias (one MXU push over all 4 pool phases) -> maxpool -> relu -> fc.

    p_ref:     (101, 36) im2col patches; rows = phase*25 + tap, last row = 1.0
    wbig_ref:  (12, 101) block-diagonal conv weight + bias column, rows = phase*3 + channel
    fcw_ref:   (36, 30)  fc weight, [pooled-pos, channel*10 + out]
    fcb_ref:   (1, 10)   fc bias
    out_ref:   (1, 10)
    """
    # One MXU push: conv (+ bias, via the augmented ones-row) for all 4 phases.
    conv12 = jnp.dot(wbig_ref[...], p_ref[...],
                     preferred_element_type=jnp.float32)              # (12, 36)

    # 2x2 max-pool = max over the 4 phase sublane-groups (bias is phase-invariant,
    # so max(conv_p + b) == max(conv_p) + b -- semantics preserved).
    pooled = jnp.maximum(
        jnp.maximum(conv12[0:NR_FILT], conv12[NR_FILT:2 * NR_FILT]),
        jnp.maximum(conv12[2 * NR_FILT:3 * NR_FILT], conv12[3 * NR_FILT:4 * NR_FILT]))

    feat = jnp.maximum(pooled, 0.0)                                   # ReLU, (3, 36)

    # Fully connected layer as one matmul; the 3 diagonal lane-blocks of the
    # (3, 30) result are the per-channel contributions -> add them up.
    pfc = jnp.dot(feat, fcw_ref[...], preferred_element_type=jnp.float32)  # (3, 30)
    out_ref[...] = (fcb_ref[...]
                    + pfc[0:1, 0:OUT_SIZE]
                    + pfc[1:2, OUT_SIZE:2 * OUT_SIZE]
                    + pfc[2:3, 2 * OUT_SIZE:3 * OUT_SIZE])


def prepare_params(conv_w, conv_b, fc_w, fc_b):
    """One-time (model-load-time) weight preparation; NOT in the per-call path."""
    w_mat = conv_w.reshape(NR_FILT, NTAP).astype(jnp.float32)                 # (3, 25)
    # Block-diagonal weight: block (p, p) holds w_mat -> one matmul does 4 phases.
    w_big = jnp.kron(jnp.eye(NPH, dtype=jnp.float32), w_mat)                  # (12, 100)
    # Bias column: row m = phase*3 + c gets conv_b[c]; pairs with the ones-row of P.
    bias_col = jnp.tile(conv_b.astype(jnp.float32), NPH)[:, None]             # (12, 1)
    w_aug = jnp.concatenate([w_big, bias_col], axis=1)                        # (12, 101)
    # PyTorch flattens (c, gi, gj); stack channels along output lanes:
    # fc_w_stacked[g, c*10 + o] = fc_w[o, c*36 + g]
    fc_w_stacked = jnp.transpose(fc_w.reshape(OUT_SIZE, NR_FILT, NG),
                                 (2, 1, 0)).reshape(NG, NR_FILT * OUT_SIZE)   # (36, 30)
    fc_w_stacked = fc_w_stacked.astype(jnp.float32)
    fc_b_row = fc_b.reshape(1, OUT_SIZE).astype(jnp.float32)                  # (1, 10)
    return w_aug, fc_w_stacked, fc_b_row


@jax.jit
def simple_cnn_forward(x, w_aug, fc_w_stacked, fc_b_row):
    """x: (1, 1, 16, 16) float32; prepared params from prepare_params()."""
    x_aug = jnp.concatenate([x.reshape(-1).astype(jnp.float32),
                             jnp.ones((1,), jnp.float32)])            # (257,)
    patches = x_aug[_FLATIDX]            # (101, 36) fused XLA gather (same jit)

    vmem = pl.BlockSpec(memory_space=pltpu.MemorySpace.VMEM)
    return pl.pallas_call(
        simple_cnn_kernel,
        out_shape=jax.ShapeDtypeStruct((1, OUT_SIZE), jnp.float32),
        in_specs=[vmem, vmem, vmem, vmem],
        out_specs=vmem,
    )(patches, w_aug, fc_w_stacked, fc_b_row)


def reference_forward(x, conv_w, conv_b, fc_w, fc_b):
    conv = jax.lax.conv_general_dilated(
        x, conv_w, (1, 1), 'VALID',
        dimension_numbers=('NCHW', 'OIHW', 'NCHW'))
    conv = conv + conv_b[None, :, None, None]
    pooled = jax.lax.reduce_window(conv, -jnp.inf, jax.lax.max,
                                   (1, 1, POOL, POOL), (1, 1, POOL, POOL), 'VALID')
    relu = jnp.maximum(pooled, 0.0)
    flat = relu.reshape(1, -1)
    return flat @ fc_w.T + fc_b[None, :]


if __name__ == "__main__":
    key = jax.random.PRNGKey(0)
    kx, k1, k2, k3, k4 = jax.random.split(key, 5)

    x = jax.random.normal(kx, (1, 1, IMG, IMG), dtype=jnp.float32)

    # Deterministic parameter init (PyTorch-like uniform ranges).
    conv_bound = 1.0 / np.sqrt(1 * KSIZE * KSIZE)
    conv_w = jax.random.uniform(k1, (NR_FILT, 1, KSIZE, KSIZE), jnp.float32,
                                -conv_bound, conv_bound)
    conv_b = jax.random.uniform(k2, (NR_FILT,), jnp.float32, -conv_bound, conv_bound)
    fc_bound = 1.0 / np.sqrt(FC_IN)
    fc_w = jax.random.uniform(k3, (OUT_SIZE, FC_IN), jnp.float32, -fc_bound, fc_bound)
    fc_b = jax.random.uniform(k4, (OUT_SIZE,), jnp.float32, -fc_bound, fc_bound)

    # One-time param prep (load time), then the per-call path is gather + 1 kernel.
    prepared = prepare_params(conv_w, conv_b, fc_w, fc_b)

    out = simple_cnn_forward(x, *prepared)
    out = jax.block_until_ready(out)

    ref = reference_forward(x, conv_w, conv_b, fc_w, fc_b)
    np.testing.assert_allclose(np.asarray(out), np.asarray(ref), rtol=1e-5, atol=1e-5)
    print("KERNEL_OK")
</pallas_src>

<mosaic_0001>
module attributes {stable_mosaic.version = 11 : i64} {
  func.func @simple_cnn_kernel(%arg0: memref<101x36xf32, #tpu.memory_space<vmem>>, %arg1: memref<12x101xf32, #tpu.memory_space<vmem>>, %arg2: memref<36x30xf32, #tpu.memory_space<vmem>>, %arg3: memref<1x10xf32, #tpu.memory_space<vmem>>, %arg4: memref<1x10xf32, #tpu.memory_space<vmem>>) attributes {dimension_semantics = [], scalar_prefetch = 0 : i64, scratch_operands = 0 : i64, tpu.core_type = #tpu.core_type<tc>} {
    %c0 = arith.constant 0 : index
    %c0_0 = arith.constant 0 : index
    %0 = vector.load %arg1[%c0, %c0_0] : memref<12x101xf32, #tpu.memory_space<vmem>>, vector<12x101xf32>
    %c0_1 = arith.constant 0 : index
    %c0_2 = arith.constant 0 : index
    %1 = vector.load %arg0[%c0_1, %c0_2] : memref<101x36xf32, #tpu.memory_space<vmem>>, vector<101x36xf32>
    %cst = arith.constant dense<0.000000e+00> : vector<12x36xf32>
    %2 = tpu.matmul %0, %1, %cst {dimension_numbers = #tpu.dot_dimension_numbers<[1], [0], [0], [1], [0, 0, 1, 1], [], []>} : vector<12x101xf32>, vector<101x36xf32>, vector<12x36xf32> -> vector<12x36xf32>
    %3 = vector.extract_strided_slice %2 {offsets = [0, 0], sizes = [3, 36], strides = [1, 1]} : vector<12x36xf32> to vector<3x36xf32>
    %4 = vector.extract_strided_slice %2 {offsets = [3, 0], sizes = [3, 36], strides = [1, 1]} : vector<12x36xf32> to vector<3x36xf32>
    %5 = arith.maximumf %3, %4 : vector<3x36xf32>
    %6 = vector.extract_strided_slice %2 {offsets = [6, 0], sizes = [3, 36], strides = [1, 1]} : vector<12x36xf32> to vector<3x36xf32>
    %7 = vector.extract_strided_slice %2 {offsets = [9, 0], sizes = [3, 36], strides = [1, 1]} : vector<12x36xf32> to vector<3x36xf32>
    %8 = arith.maximumf %6, %7 : vector<3x36xf32>
    %9 = arith.maximumf %5, %8 : vector<3x36xf32>
    %cst_3 = arith.constant 0.000000e+00 : f32
    %10 = vector.broadcast %cst_3 : f32 to vector<3x36xf32>
    %11 = arith.maximumf %9, %10 : vector<3x36xf32>
    %c0_4 = arith.constant 0 : index
    %c0_5 = arith.constant 0 : index
    %12 = vector.load %arg2[%c0_4, %c0_5] : memref<36x30xf32, #tpu.memory_space<vmem>>, vector<36x30xf32>
    %cst_6 = arith.constant dense<0.000000e+00> : vector<3x30xf32>
    %13 = tpu.matmul %11, %12, %cst_6 {dimension_numbers = #tpu.dot_dimension_numbers<[1], [0], [0], [1], [0, 0, 1, 1], [], []>} : vector<3x36xf32>, vector<36x30xf32>, vector<3x30xf32> -> vector<3x30xf32>
    %c0_7 = arith.constant 0 : index
    %c0_8 = arith.constant 0 : index
    %14 = vector.load %arg3[%c0_7, %c0_8] : memref<1x10xf32, #tpu.memory_space<vmem>>, vector<1x10xf32>
    %15 = vector.extract_strided_slice %13 {offsets = [0, 0], sizes = [1, 10], strides = [1, 1]} : vector<3x30xf32> to vector<1x10xf32>
    %16 = arith.addf %14, %15 : vector<1x10xf32>
    %17 = vector.extract_strided_slice %13 {offsets = [1, 10], sizes = [1, 10], strides = [1, 1]} : vector<3x30xf32> to vector<1x10xf32>
    %18 = arith.addf %16, %17 : vector<1x10xf32>
    %19 = vector.extract_strided_slice %13 {offsets = [2, 20], sizes = [1, 10], strides = [1, 1]} : vector<3x30xf32> to vector<1x10xf32>
    %20 = arith.addf %18, %19 : vector<1x10xf32>
    %c0_9 = arith.constant 0 : index
    %c0_10 = arith.constant 0 : index
    %21 = vector.load %arg4[%c0_9, %c0_10] : memref<1x10xf32, #tpu.memory_space<vmem>>, vector<1x10xf32>
    tpu.vector_store %arg4[%c0_9, %c0_10], %20 {strides = array<i32>} : memref<1x10xf32, #tpu.memory_space<vmem>>, vector<1x10xf32>,
    return
  }
}

</mosaic_0001>

<llo_original>
// kernel: simple_cnn_forward.1
$region0: #{simple_cnn_forward.1}
  #allocation0 [shape = 'u32[]', space=smem, size = 0x4, offset = 0x4, fixed_abs, tag = 'smem constant byte address 0x4 - core index']
  #allocation1 [shape = 'u32[144,128]{1,0:T(1,128)}', space=vmem, size = 0x12000, scoped, tag = 'internal scratch']
  %s0 = inlined_call_operand.vmem [shape: f32[101,36], index: 0, kind: input, shape index: {}]
  %s1 = inlined_call_operand.vmem [shape: f32[12,101], index: 1, kind: input, shape index: {}]
  %s2 = inlined_call_operand.vmem [shape: f32[36,30], index: 2, kind: input, shape index: {}]
  %s3 = inlined_call_operand.vmem [shape: f32[1,10], index: 3, kind: input, shape index: {}]
  %s4 = inlined_call_operand.hbm [shape: f32[1,10], index: 4, kind: output, shape index: {}]
  %s5 = sld [smem:[#allocation0]]
  $region26: #{simple_cnn_forward.1} parent=0
    _
  %s7 = ssub.s32 1, %s5
  %s8 = scalar_select 0, %s7, %s5
  $region1: #{simple_cnn_forward.1} parent=0
    #allocation2 [shape = 'u8[512]{0}', space=vmem, size = 0x400, scoped, tag = 'output window, operand 0, single buffered']
    #allocation3 [shape = 's32[1]{0}', space=sflag, size = 0x4, scoped, tag = 'scoped memory for simple_cnn_forward.1']
    %9 = vsyncpa [#allocation3], 0
    // Predicated region
    $region2: #{simple_cnn_forward.1} parent=1 // pred_check
      _
    $region3: #{simple_cnn_forward.1} parent=1 // pred_check_branch
      %11 = sbr.rel (0) target = $region5
    $region4: #{simple_cnn_forward.1} parent=1 // pred_region
      _
    $region5: #{simple_cnn_forward.1} parent=1 // pred_fallthru
      _
    // Predicated region
    $region6: #{simple_cnn_forward.1} parent=1 // pred_check
      _
    $region7: #{simple_cnn_forward.1} parent=1 // pred_check_branch
      %13 = sbr.rel (0) target = $region9
    $region8: #{simple_cnn_forward.1} parent=1 // pred_region
      _
    $region9: #{simple_cnn_forward.1} parent=1 // pred_fallthru
      _
    // Predicated region
    $region10: #{simple_cnn_forward.1} parent=1 // pred_check
      _
    $region11: #{simple_cnn_forward.1} parent=1 // pred_check_branch
      %15 = sbr.rel (0) target = $region13
    $region12: #{simple_cnn_forward.1} parent=1 // pred_region
      _
    $region13: #{simple_cnn_forward.1} parent=1 // pred_fallthru
      _
    // Predicated region
    $region14: #{simple_cnn_forward.1} parent=1 // pred_check
      _
    $region15: #{simple_cnn_forward.1} parent=1 // pred_check_branch
      %17 = sbr.rel (0) target = $region17
    $region16: #{simple_cnn_forward.1} parent=1 // pred_region
      _
    $region17: #{simple_cnn_forward.1} parent=1 // pred_fallthru
      _
    %v18 = vld [vmem:[%s1] sm:$0xff]
    %v19 = vld [vmem:[%s1 + $0x8] sm:$0xf]
    %v20 = vld [vmem:[%s0] sm:$0xff]
    %v21 = vld [vmem:[%s0 + $0x8] sm:$0xff]
    %v22 = vld [vmem:[%s0 + $0x10] sm:$0xff]
    %v23 = vld [vmem:[%s0 + $0x18] sm:$0xff]
    %v24 = vld [vmem:[%s0 + $0x20] sm:$0xff]
    %v25 = vld [vmem:[%s0 + $0x28] sm:$0xff]
    %v26 = vld [vmem:[%s0 + $0x30] sm:$0xff]
    %v27 = vld [vmem:[%s0 + $0x38] sm:$0xff]
    %v28 = vld [vmem:[%s0 + $0x40] sm:$0xff]
    %v29 = vld [vmem:[%s0 + $0x48] sm:$0xff]
    %v30 = vld [vmem:[%s0 + $0x50] sm:$0xff]
    %v31 = vld [vmem:[%s0 + $0x58] sm:$0xff]
    %v32 = vld [vmem:[%s0 + $0x60] sm:$0x1f]
    %vm33 = vcmask 826368
    %v35 = vsel %vm33, %v18, 0
    %v38 = vsel %vm33, %v19, 0
    %vm40 = vcmask 1044480
    %v42 = vsel %vm40, %v32, 0
    %44 = vmatprep.subr.mxu0 0.0
    %45 = vmatpush1.msra.mxu0 %v20
    %46 = vmatprep.subr.mxu0 0.0
    %47 = vmatpush1.msra.mxu0 %v21
    %48 = vmatprep.subr.mxu0 0.0
    %49 = vmatpush1.msra.mxu0 %v22
    %50 = vmatprep.subr.mxu0 0.0
    %51 = vmatpush1.msra.mxu0 %v23
    %52 = vmatprep.subr.mxu0 0.0
    %53 = vmatpush1.msra.mxu0 %v24
    %54 = vmatprep.subr.mxu0 0.0
    %55 = vmatpush1.msra.mxu0 %v25
    %56 = vmatprep.subr.mxu0 0.0
    %57 = vmatpush1.msra.mxu0 %v26
    %58 = vmatprep.subr.mxu0 0.0
    %59 = vmatpush1.msra.mxu0 %v27
    %60 = vmatprep.subr.mxu0 0.0
    %61 = vmatpush1.msra.mxu0 %v28
    %62 = vmatprep.subr.mxu0 0.0
    %63 = vmatpush1.msra.mxu0 %v29
    %64 = vmatprep.subr.mxu0 0.0
    %65 = vmatpush1.msra.mxu0 %v30
    %66 = vmatprep.subr.mxu0 0.0
    %67 = vmatpush1.msra.mxu0 %v31
    %68 = vmatprep.subr.mxu0 0.0
    %69 = vmatpush1.msra.mxu0 %v42
    %70 = vmatprep.subr.mxu0 0.0
    %71 = vmatpush1.msra.mxu0 0.0
    %72 = vmatprep.subr.mxu0 0.0
    %73 = vmatpush1.msra.mxu0 0.0
    %74 = vmatprep.subr.mxu0 0.0
    %75 = vmatpush1.msra.mxu0 0.0
    %76 = vmatprep.subr.mxu0 0.0
    %77 = vmatpush1.msra.mxu0 0.0
    %78 = vmatprep.subr.mxu0 0.0
    %79 = vmatpush1.msra.mxu0 0.0
    %80 = vmatprep.subr.mxu0 0.0
    %81 = vmatpush1.msra.mxu0 0.0
    %82 = vmatprep.subr.mxu0 0.0
    %83 = vmatpush1.msra.mxu0 0.0
    %84 = vmatprep.subr.mxu0 0.0
    %85 = vmatpush1.msra.mxu0 0.0
    %86 = vmatprep.subr.mxu0 0.0
    %87 = vmatpush1.msra.mxu0 0.0
    %88 = vmatprep.subr.mxu0 0.0
    %89 = vmatpush1.msra.mxu0 0.0
    %90 = vmatprep.subr.mxu0 0.0
    %91 = vmatpush1.msra.mxu0 0.0
    %92 = vmatprep.subr.mxu0 0.0
    %93 = vmatpush1.msra.mxu0 0.0
    %94 = vmatprep.subr.mxu0 0.0
    %95 = vmatpush1.msra.mxu0 0.0
    %96 = vmatprep.subr.mxu0 0.0
    %97 = vmatpush1.msra.mxu0 0.0
    %98 = vmatprep.subr.mxu0 0.0
    %99 = vmatpush1.msra.mxu0 0.0
    %100 = vmatprep.subr.mxu0 0.0
    %101 = vmatpush1.msra.mxu0 0.0
    %102 = vmatprep.subr.mxu0 0.0
    %103 = vmatpush1.msra.mxu0 0.0
    %104 = vmatprep.subr.mxu0 0.0
    %105 = vmatpush1.msra.mxu0 0.0
    %106 = vmatprep.subr.mxu0 0.0
    %107 = vmatpush1.msra.mxu0 0.0
    %108 = vmatprep.mubr.f32.mxu0 0.0
    %109 = vmatmul.mubr.f32.gmra.mrb[0].mxu0 %v35
    %v110 = vpop.f32.mrb[0].mxu0
    %v111 = vadd.f32 0.0, %v110
    %v112 = vpop.f32.mrb[0].mxu0
    %113 = vmatprep.mubr.f32.mxu0 0.0
    %114 = vmatmul.mubr.f32.gmra.mrb[0].mxu0 %v38
    %v115 = vpop.f32.mrb[0].mxu0
    %v116 = vadd.f32 0.0, %v115
    %v117 = vpop.f32.mrb[0].mxu0
    %118 = vdwg.mxu0
    %v120 = vrot.slane %v111, 3
    %v122 = vmax.f32 %v111, %v120
    %v124 = vrot.slane %v116, 3
    %v126 = vmax.f32 %v111, %v124
    %v127 = vmax.f32 %v116, %v124
    %vm130 = vcmask 1041408
    %v131 = vrot.slane %v126, 6
    %v132 = vrot.slane %v127, 6
    %v133 = vsel %vm130, %v131, %v132
    %v135 = vmax.f32 %v122, %v133
    %v136 = vmax.f32 %v135, 0.0
    %v137 = vld [vmem:[%s2] sm:$0xff]
    %v138 = vld [vmem:[%s2 + $0x8] sm:$0xff]
    %v139 = vld [vmem:[%s2 + $0x10] sm:$0xff]
    %v140 = vld [vmem:[%s2 + $0x18] sm:$0xff]
    %v141 = vld [vmem:[%s2 + $0x20] sm:$0xf]
    %vm142 = vcmask 293888
    %v144 = vsel %vm142, %v136, 0
    %vm146 = vcmask 1043456
    %v148 = vsel %vm146, %v141, 0
    %150 = vmatprep.subr.mxu0 0.0
    %151 = vmatpush1.msra.mxu0 %v137
    %152 = vmatprep.subr.mxu0 0.0
    %153 = vmatpush1.msra.mxu0 %v138
    %154 = vmatprep.subr.mxu0 0.0
    %155 = vmatpush1.msra.mxu0 %v139
    %156 = vmatprep.subr.mxu0 0.0
    %157 = vmatpush1.msra.mxu0 %v140
    %158 = vmatprep.subr.mxu0 0.0
    %159 = vmatpush1.msra.mxu0 %v148
    %160 = vmatprep.subr.mxu0 0.0
    %161 = vmatpush1.msra.mxu0 0.0
    %162 = vmatprep.subr.mxu0 0.0
    %163 = vmatpush1.msra.mxu0 0.0
    %164 = vmatprep.subr.mxu0 0.0
    %165 = vmatpush1.msra.mxu0 0.0
    %166 = vmatprep.subr.mxu0 0.0
    %167 = vmatpush1.msra.mxu0 0.0
    %168 = vmatprep.subr.mxu0 0.0
    %169 = vmatpush1.msra.mxu0 0.0
    %170 = vmatprep.subr.mxu0 0.0
    %171 = vmatpush1.msra.mxu0 0.0
    %172 = vmatprep.subr.mxu0 0.0
    %173 = vmatpush1.msra.mxu0 0.0
    %174 = vmatprep.subr.mxu0 0.0
    %175 = vmatpush1.msra.mxu0 0.0
    %176 = vmatprep.subr.mxu0 0.0
    %177 = vmatpush1.msra.mxu0 0.0
    %178 = vmatprep.subr.mxu0 0.0
    %179 = vmatpush1.msra.mxu0 0.0
    %180 = vmatprep.subr.mxu0 0.0
    %181 = vmatpush1.msra.mxu0 0.0
    %182 = vmatprep.subr.mxu0 0.0
    %183 = vmatpush1.msra.mxu0 0.0
    %184 = vmatprep.subr.mxu0 0.0
    %185 = vmatpush1.msra.mxu0 0.0
    %186 = vmatprep.subr.mxu0 0.0
    %187 = vmatpush1.msra.mxu0 0.0
    %188 = vmatprep.subr.mxu0 0.0
    %189 = vmatpush1.msra.mxu0 0.0
    %190 = vmatprep.subr.mxu0 0.0
    %191 = vmatpush1.msra.mxu0 0.0
    %192 = vmatprep.subr.mxu0 0.0
    %193 = vmatpush1.msra.mxu0 0.0
    %194 = vmatprep.subr.mxu0 0.0
    %195 = vmatpush1.msra.mxu0 0.0
    %196 = vmatprep.subr.mxu0 0.0
    %197 = vmatpush1.msra.mxu0 0.0
    %198 = vmatprep.subr.mxu0 0.0
    %199 = vmatpush1.msra.mxu0 0.0
    %200 = vmatprep.subr.mxu0 0.0
    %201 = vmatpush1.msra.mxu0 0.0
    %202 = vmatprep.subr.mxu0 0.0
    %203 = vmatpush1.msra.mxu0 0.0
    %204 = vmatprep.subr.mxu0 0.0
    %205 = vmatpush1.msra.mxu0 0.0
    %206 = vmatprep.subr.mxu0 0.0
    %207 = vmatpush1.msra.mxu0 0.0
    %208 = vmatprep.subr.mxu0 0.0
    %209 = vmatpush1.msra.mxu0 0.0
    %210 = vmatprep.subr.mxu0 0.0
    %211 = vmatpush1.msra.mxu0 0.0
    %212 = vmatprep.subr.mxu0 0.0
    %213 = vmatpush1.msra.mxu0 0.0
    %214 = vmatprep.mubr.f32.mxu0 0.0
    %215 = vmatmul.mubr.f32.gmra.mrb[0].mxu0 %v144
    %v216 = vpop.f32.mrb[0].mxu0
    %v217 = vadd.f32 0.0, %v216
    %v218 = vpop.f32.mrb[0].mxu0
    %219 = vdwg.mxu0
    %v220 = vld [vmem:[%s3] sm:$0x1]
    %v221 = vadd.f32 %v220, %v217
    %v224 = vunpack.c.l.s4 1966171168
    %v225 = vunpack.c.0.s8 %v224
    %v226 = vlaneseq
    %v227 = vshrl.u32 %v226, 7
    %v228 = vsub.s32 %v225, %v227
    %v229 = vrot.slane %v217, %v228
    %v230 = vcombine.high %v229, %v229
    %v232 = vunpack.c.l.s4 1966171168
    %v233 = vunpack.c.0.s8 %v232
    %v234 = vlaneseq
    %v235 = vshrl.u32 %v234, 7
    %v236 = vsub.s32 %v233, %v235
    %v237 = vrot.slane %v229, %v236
    %v239 = vunpack.c.l.s4 1966171168
    %v240 = vunpack.c.0.s8 %v239
    %v241 = vlaneseq
    %v242 = vshrl.u32 %v241, 7
    %v243 = vsub.s32 %v240, %v242
    %v244 = vrot.slane %v230, %v243
    %245 = vrot.lane.b32.xlu0 %v244, 118
    %v246 = vpop.permute.xlu0 %245
    %v248 = vadd.f32 %v221, %v246
    %v249 = vcombine.high %v237, %v237
    %250 = vrot.lane.b32.xlu0 %v249, 108
    %v251 = vpop.permute.xlu0 %250
    %v253 = vadd.f32 %v248, %v251
    %vm254 = vcmask 73728
    %255 = vst.msk [vmem:[#allocation2] sm:$0x1] %vm254, %v253
    // Predicated region
    $region18: #{simple_cnn_forward.1} parent=1 // pred_check
      _
    $region19: #{simple_cnn_forward.1} parent=1 // pred_check_branch
      %257 = sbr.rel (0) target = $region21
    $region20: #{simple_cnn_forward.1} parent=1 // pred_region
      %s259 = ssub.s32 16, 16
      %260 = vsyncadd [#allocation3], %s259
      %s262 = sshll.u32 [#allocation2], 4
      %s263 = int_to_ptr.vmem [resolvable:$true] %s262
      %265 = dma.vmem_to_hbm [thread:$0]  %s263, 16, %s4, [#allocation3]
    $region21: #{simple_cnn_forward.1} parent=1 // pred_fallthru
      _
    // Predicated region
    $region22: #{simple_cnn_forward.1} parent=1 // pred_check
      _
    $region23: #{simple_cnn_forward.1} parent=1 // pred_check_branch
      %267 = sbr.rel (0) target = $region25
    $region24: #{simple_cnn_forward.1} parent=1 // pred_region
      %268 = dma.done [#allocation3], 16
    $region25: #{simple_cnn_forward.1} parent=1 // pred_fallthru
      _
    %269 = vsyncpa [#allocation3], 1

</llo_original>
